<compile_context>
chip_gen: v7x
topology: tpu7x:2x2x1
jax: 0.10.0
libtpu: 0.0.40
codegen_flags: <defaults>
</compile_context>

<pallas_src>
import jax
import jax.numpy as jnp
from jax.experimental import pallas as pl
from jax.experimental.pallas import tpu as pltpu

BACKGROUND_COLOR = (1.0, 1.0, 1.0)   # BlendParams() default background_color


def _shader_kernel(cols_ref, bg_ref, bary_ref, p2f_ref, rgba_ref):
    # cols_ref : (3, 8, Fp) f32  cols_ref[v, c, f] = channel c of vertex v of face f
    #                            (rows 3..7 and faces >= F are zero padding)
    # bg_ref   : (8, 1)     f32  rows 0..2 = background RGB, row 3 = 1.0 (alpha)
    # bary_ref : (1, 3, T)  f32  barycentric weights of the K=0 face
    # p2f_ref  : (1, 1, T)  i32  pix_to_face of the K=0 face (-1 = background)
    # rgba_ref : (1, 4, T)  f32  output RGBA (lane-dense pixel axis)
    Fp = cols_ref.shape[-1]

    face = p2f_ref[0]                                  # (1, T) int32
    is_bg = face < 0                                   # (1, T)

    bary = bary_ref[0]                                 # (3, T)

    # Face one-hot computed ONCE (vertex id is implicit in the grouped packing),
    # reused for all three barycentric weights: compare + 3 selects ~= 4*F*T ops.
    face_col = jax.lax.broadcasted_iota(jnp.int32, (Fp, 1), 0)
    onehot = face_col == face                          # (Fp, T); bg matches no column

    # Fused gather + barycentric interpolation on the MXU:
    #   texel[c, t] = sum_v colors[face[t], v, c] * bary[v, t]
    # NOTE: could be done in bf16 on v6e/v7x for ~2x VALU / half VMEM, but that
    # exceeds the 1e-5 test tolerance, so kept in f32.
    texel = jnp.dot(cols_ref[0], jnp.where(onehot, bary[0:1, :], 0.0),
                    preferred_element_type=jnp.float32)
    texel += jnp.dot(cols_ref[1], jnp.where(onehot, bary[1:2, :], 0.0),
                     preferred_element_type=jnp.float32)
    texel += jnp.dot(cols_ref[2], jnp.where(onehot, bary[2:3, :], 0.0),
                     preferred_element_type=jnp.float32)          # (8, T)

    # hard_rgb_blend, vectorized: one (4,T) select + one lane-dense store.
    # Row 3 (alpha) always takes the bg_ref value, which is exactly 1.0.
    row = jax.lax.broadcasted_iota(jnp.int32, (4, 1), 0)
    take_bg = jnp.logical_or(is_bg, row == 3)          # (4, T)
    rgba_ref[0] = jnp.where(take_bg, bg_ref[0:4, :], texel[0:4, :])


def simple_shader(pix_to_face, bary_coords, zbuf, face_vertex_colors,
                  *, tile_pixels=8192, vmem_target_bytes=32 * 1024 * 1024):
    """Pallas implementation of SimpleShader.forward.

    pix_to_face:        (N, H, W, K) int     (-1 = background)
    bary_coords:        (N, H, W, K, 3) f32
    zbuf:               (N, H, W, K) f32
    face_vertex_colors: (F, 3, 3) f32        (per-face per-vertex RGB, TexturesVertex)
    returns:            (N, H, W, 4 + K) f32
    """
    N, H, W, K = pix_to_face.shape
    F = face_vertex_colors.shape[0]
    P = H * W

    # ---- color path uses only the K=0 face slot (hard_rgb_blend discards K>0).
    p2f0 = pix_to_face[..., 0].astype(jnp.int32).reshape(N, 1, P)            # (N,1,P)
    bary0 = (bary_coords[..., 0, :].astype(jnp.float32)
             .reshape(N, P, 3).transpose(0, 2, 1))                           # (N,3,P)

    # ---- face colors grouped by vertex id for the single-one-hot MXU gather.
    Fp = max(128, ((F + 127) // 128) * 128)
    cols3 = jnp.zeros((3, 8, Fp), jnp.float32).at[:, :3, :F].set(
        jnp.transpose(face_vertex_colors.astype(jnp.float32), (1, 2, 0)))    # (3,8,Fp)

    # Background RGB + alpha as a tiny VMEM input (no captured array constants).
    bg = jnp.zeros((8, 1), jnp.float32)
    bg = bg.at[0, 0].set(BACKGROUND_COLOR[0]).at[1, 0].set(BACKGROUND_COLOR[1])
    bg = bg.at[2, 0].set(BACKGROUND_COLOR[2]).at[3, 0].set(1.0)

    # ---- pixel tile: as large as the VMEM budget allows (kernel moves only ~64 B
    # per pixel, so it is per-grid-step-overhead bound, not bandwidth bound).
    bytes_per_pixel = 16 * Fp + 64           # mask + 3x(Fp,T) wt + double-buffered io
    fixed_bytes = 2 * (3 * 8 * Fp * 4) + (1 << 20)
    t_vmem = max(128, ((vmem_target_bytes - fixed_bytes) // bytes_per_pixel)
                 // 128 * 128)
    P_up = ((P + 127) // 128) * 128
    T = max(128, min((tile_pixels // 128) * 128, t_vmem, P_up))
    num_tiles = -(-P // T)                   # partial last tile is write-masked
    # TODO(synk): for very large F, add an 'arbitrary' face-chunk grid axis with a
    #             VMEM accumulator (or a manual DMA-gather path) to bound Fp per step.

    rgba = pl.pallas_call(
        _shader_kernel,
        out_shape=jax.ShapeDtypeStruct((N, 4, P), jnp.float32),
        grid_spec=pltpu.PrefetchScalarGridSpec(
            num_scalar_prefetch=0,
            grid=(N, num_tiles),
            in_specs=[
                pl.BlockSpec((3, 8, Fp), lambda n, p: (0, 0, 0)),
                pl.BlockSpec((8, 1), lambda n, p: (0, 0)),
                pl.BlockSpec((1, 3, T), lambda n, p: (n, 0, p)),
                pl.BlockSpec((1, 1, T), lambda n, p: (n, 0, p)),
            ],
            out_specs=pl.BlockSpec((1, 4, T), lambda n, p: (n, 0, p)),
        ),
        compiler_params=pltpu.CompilerParams(
            dimension_semantics=("parallel", "parallel"),
            vmem_limit_bytes=48 * 1024 * 1024),   # headroom under v7x's 64 MiB VMEM
    )(cols3, bg, bary0, p2f0)

    # Glue back to PyTorch convention; fragments.zbuf is a pure passthrough.
    rgba = rgba.transpose(0, 2, 1).reshape(N, H, W, 4)
    return jnp.concatenate([rgba, zbuf.astype(jnp.float32)], axis=-1)


if __name__ == "__main__":
    key = jax.random.PRNGKey(0)
    N, H, W, K = 2, 16, 16, 2      # fragments rasterized with faces_per_pixel K
    V, F = 9, 12                   # small synthetic mesh
    k1, k2, k3, k4, k5 = jax.random.split(key, 5)

    # "meshes" side (TexturesVertex): vertex colors + face->vertex indices
    verts_colors = jax.random.uniform(k1, (V, 3), dtype=jnp.float32)
    faces = jax.random.randint(k2, (F, 3), 0, V, dtype=jnp.int32)
    face_vertex_colors = verts_colors[faces]                     # (F, 3, 3)

    # "fragments" side
    pix_to_face = jax.random.randint(k3, (N, H, W, K), -1, F, dtype=jnp.int32)
    bary_raw = jax.random.uniform(k4, (N, H, W, K, 3), dtype=jnp.float32) + 1e-3
    bary_coords = bary_raw / jnp.sum(bary_raw, axis=-1, keepdims=True)
    zbuf = jax.random.uniform(k5, (N, H, W, K), dtype=jnp.float32)

    out = simple_shader(pix_to_face, bary_coords, zbuf, face_vertex_colors)
    out = jax.block_until_ready(out)

    # Plain-JAX reference (sample_textures + hard_rgb_blend + cat)
    cols = face_vertex_colors[jnp.maximum(pix_to_face, 0)]       # (N,H,W,K,3,3)
    texels = jnp.sum(bary_coords[..., None] * cols, axis=-2)     # (N,H,W,K,3)
    texels = jnp.where((pix_to_face < 0)[..., None], 0.0, texels)
    is_bg = (pix_to_face[..., 0] < 0)[..., None]
    bg = jnp.array(BACKGROUND_COLOR, jnp.float32)
    pix_cols = jnp.where(is_bg, bg, texels[..., 0, :])
    ref = jnp.concatenate(
        [pix_cols, jnp.ones_like(pix_cols[..., :1]), zbuf], axis=-1)

    assert out.shape == (N, H, W, 4 + K) and out.dtype == jnp.float32
    assert jnp.allclose(out, ref, atol=1e-5, rtol=1e-5)
    print("KERNEL_OK")
</pallas_src>

<mosaic_0001>
module attributes {stable_mosaic.version = 11 : i64} {
  func.func @_shader_kernel(%arg0: i32, %arg1: i32, %arg2: memref<3x8x128xf32, #tpu.memory_space<vmem>>, %arg3: memref<8x1xf32, #tpu.memory_space<vmem>>, %arg4: memref<1x3x256xf32, #tpu.memory_space<vmem>>, %arg5: memref<1x1x256xi32, #tpu.memory_space<vmem>>, %arg6: memref<1x4x256xf32, #tpu.memory_space<vmem>>) attributes {dimension_semantics = [#tpu.dimension_semantics<parallel>, #tpu.dimension_semantics<parallel>], iteration_bounds = array<i64: 2, 1>, scalar_prefetch = 0 : i64, scratch_operands = 0 : i64, tpu.core_type = #tpu.core_type<tc>, window_params = [{pipeline_mode = #tpu.pipeline_mode<synchronous>, transform_indices = @transform_0, window_bounds = array<i64: 3, 8, 128>}, {pipeline_mode = #tpu.pipeline_mode<synchronous>, transform_indices = @transform_1, window_bounds = array<i64: 8, 1>}, {transform_indices = @transform_2, window_bounds = array<i64: 1, 3, 256>}, {transform_indices = @transform_3, window_bounds = array<i64: 1, 1, 256>}, {transform_indices = @transform_4, window_bounds = array<i64: 1, 4, 256>}]} {
    %c0 = arith.constant 0 : index
    %c0_0 = arith.constant 0 : index
    %c0_1 = arith.constant 0 : index
    %0 = vector.load %arg5[%c0, %c0_0, %c0_1] : memref<1x1x256xi32, #tpu.memory_space<vmem>>, vector<1x1x256xi32>
    %1 = vector.shape_cast %0 : vector<1x1x256xi32> to vector<1x256xi32>
    %c0_i32 = arith.constant 0 : i32
    %2 = vector.broadcast %c0_i32 : i32 to vector<1x256xi32>
    %3 = arith.cmpi slt, %1, %2 : vector<1x256xi32>
    %c0_2 = arith.constant 0 : index
    %c0_3 = arith.constant 0 : index
    %c0_4 = arith.constant 0 : index
    %4 = vector.load %arg4[%c0_2, %c0_3, %c0_4] : memref<1x3x256xf32, #tpu.memory_space<vmem>>, vector<1x3x256xf32>
    %5 = vector.shape_cast %4 : vector<1x3x256xf32> to vector<3x256xf32>
    %6 = tpu.iota {dimensions = array<i32: 0>} : vector<128x1xi32>
    %7 = vector.broadcast %6 : vector<128x1xi32> to vector<128x256xi32>
    %8 = vector.broadcast %1 : vector<1x256xi32> to vector<128x256xi32>
    %9 = arith.cmpi eq, %7, %8 : vector<128x256xi32>
    %c0_5 = arith.constant 0 : index
    %c0_6 = arith.constant 0 : index
    %c0_7 = arith.constant 0 : index
    %10 = vector.load %arg2[%c0_5, %c0_6, %c0_7] : memref<3x8x128xf32, #tpu.memory_space<vmem>>, vector<1x8x128xf32>
    %11 = vector.shape_cast %10 : vector<1x8x128xf32> to vector<8x128xf32>
    %12 = vector.extract_strided_slice %5 {offsets = [0, 0], sizes = [1, 256], strides = [1, 1]} : vector<3x256xf32> to vector<1x256xf32>
    %cst = arith.constant 0.000000e+00 : f32
    %13 = vector.shape_cast %12 : vector<1x256xf32> to vector<1x256xf32>
    %14 = vector.broadcast %13 : vector<1x256xf32> to vector<128x256xf32>
    %15 = vector.broadcast %cst : f32 to vector<128x256xf32>
    %16 = arith.select %9, %14, %15 : vector<128x256xi1>, vector<128x256xf32>
    %cst_8 = arith.constant dense<0.000000e+00> : vector<8x256xf32>
    %17 = tpu.matmul %11, %16, %cst_8 {dimension_numbers = #tpu.dot_dimension_numbers<[1], [0], [0], [1], [0, 0, 1, 1], [], []>} : vector<8x128xf32>, vector<128x256xf32>, vector<8x256xf32> -> vector<8x256xf32>
    %c1 = arith.constant 1 : index
    %c0_9 = arith.constant 0 : index
    %c0_10 = arith.constant 0 : index
    %18 = vector.load %arg2[%c1, %c0_9, %c0_10] : memref<3x8x128xf32, #tpu.memory_space<vmem>>, vector<1x8x128xf32>
    %19 = vector.shape_cast %18 : vector<1x8x128xf32> to vector<8x128xf32>
    %20 = vector.extract_strided_slice %5 {offsets = [1, 0], sizes = [1, 256], strides = [1, 1]} : vector<3x256xf32> to vector<1x256xf32>
    %cst_11 = arith.constant 0.000000e+00 : f32
    %21 = vector.shape_cast %20 : vector<1x256xf32> to vector<1x256xf32>
    %22 = vector.broadcast %21 : vector<1x256xf32> to vector<128x256xf32>
    %23 = vector.broadcast %cst_11 : f32 to vector<128x256xf32>
    %24 = arith.select %9, %22, %23 : vector<128x256xi1>, vector<128x256xf32>
    %cst_12 = arith.constant dense<0.000000e+00> : vector<8x256xf32>
    %25 = tpu.matmul %19, %24, %cst_12 {dimension_numbers = #tpu.dot_dimension_numbers<[1], [0], [0], [1], [0, 0, 1, 1], [], []>} : vector<8x128xf32>, vector<128x256xf32>, vector<8x256xf32> -> vector<8x256xf32>
    %26 = arith.addf %17, %25 : vector<8x256xf32>
    %c2 = arith.constant 2 : index
    %c0_13 = arith.constant 0 : index
    %c0_14 = arith.constant 0 : index
    %27 = vector.load %arg2[%c2, %c0_13, %c0_14] : memref<3x8x128xf32, #tpu.memory_space<vmem>>, vector<1x8x128xf32>
    %28 = vector.shape_cast %27 : vector<1x8x128xf32> to vector<8x128xf32>
    %29 = vector.extract_strided_slice %5 {offsets = [2, 0], sizes = [1, 256], strides = [1, 1]} : vector<3x256xf32> to vector<1x256xf32>
    %cst_15 = arith.constant 0.000000e+00 : f32
    %30 = vector.shape_cast %29 : vector<1x256xf32> to vector<1x256xf32>
    %31 = vector.broadcast %30 : vector<1x256xf32> to vector<128x256xf32>
    %32 = vector.broadcast %cst_15 : f32 to vector<128x256xf32>
    %33 = arith.select %9, %31, %32 : vector<128x256xi1>, vector<128x256xf32>
    %cst_16 = arith.constant dense<0.000000e+00> : vector<8x256xf32>
    %34 = tpu.matmul %28, %33, %cst_16 {dimension_numbers = #tpu.dot_dimension_numbers<[1], [0], [0], [1], [0, 0, 1, 1], [], []>} : vector<8x128xf32>, vector<128x256xf32>, vector<8x256xf32> -> vector<8x256xf32>
    %35 = arith.addf %26, %34 : vector<8x256xf32>
    %36 = tpu.iota {dimensions = array<i32: 0>} : vector<4x1xi32>
    %c3_i32 = arith.constant 3 : i32
    %37 = vector.broadcast %c3_i32 : i32 to vector<4x1xi32>
    %38 = arith.cmpi eq, %36, %37 : vector<4x1xi32>
    %39 = vector.broadcast %3 : vector<1x256xi1> to vector<4x256xi1>
    %40 = vector.broadcast %38 : vector<4x1xi1> to vector<4x256xi1>
    %41 = arith.ori %39, %40 : vector<4x256xi1>
    %c0_17 = arith.constant 0 : index
    %c0_18 = arith.constant 0 : index
    %42 = vector.load %arg3[%c0_17, %c0_18] : memref<8x1xf32, #tpu.memory_space<vmem>>, vector<4x1xf32>
    %43 = vector.extract_strided_slice %35 {offsets = [0, 0], sizes = [4, 256], strides = [1, 1]} : vector<8x256xf32> to vector<4x256xf32>
    %44 = vector.shape_cast %42 : vector<4x1xf32> to vector<4x1xf32>
    %45 = vector.broadcast %44 : vector<4x1xf32> to vector<4x256xf32>
    %46 = arith.select %41, %45, %43 : vector<4x256xi1>, vector<4x256xf32>
    %c0_19 = arith.constant 0 : index
    %c0_20 = arith.constant 0 : index
    %c0_21 = arith.constant 0 : index
    %47 = vector.load %arg6[%c0_19, %c0_20, %c0_21] : memref<1x4x256xf32, #tpu.memory_space<vmem>>, vector<1x4x256xf32>
    %48 = vector.shape_cast %47 : vector<1x4x256xf32> to vector<4x256xf32>
    %49 = vector.shape_cast %46 : vector<4x256xf32> to vector<1x4x256xf32>
    tpu.vector_store %arg6[%c0_19, %c0_20, %c0_21], %49 {strides = array<i32>} : memref<1x4x256xf32, #tpu.memory_space<vmem>>, vector<1x4x256xf32>,
    return
  }
  func.func @transform_0(%arg0: i32, %arg1: i32) -> (i32, i32, i32) {
    %c0_i32 = arith.constant 0 : i32
    %c0_i32_0 = arith.constant 0 : i32
    %c0_i32_1 = arith.constant 0 : i32
    %c0_i32_2 = arith.constant 0 : i32
    return %c0_i32, %c0_i32_0, %c0_i32_1 : i32, i32, i32
  }
  func.func @transform_1(%arg0: i32, %arg1: i32) -> (i32, i32) {
    %c0_i32 = arith.constant 0 : i32
    %c0_i32_0 = arith.constant 0 : i32
    %c0_i32_1 = arith.constant 0 : i32
    return %c0_i32, %c0_i32_0 : i32, i32
  }
  func.func @transform_2(%arg0: i32, %arg1: i32) -> (i32, i32, i32) {
    %c0_i32 = arith.constant 0 : i32
    %c0_i32_0 = arith.constant 0 : i32
    return %arg0, %c0_i32, %arg1 : i32, i32, i32
  }
  func.func @transform_3(%arg0: i32, %arg1: i32) -> (i32, i32, i32) {
    %c0_i32 = arith.constant 0 : i32
    %c0_i32_0 = arith.constant 0 : i32
    return %arg0, %c0_i32, %arg1 : i32, i32, i32
  }
  func.func @transform_4(%arg0: i32, %arg1: i32) -> (i32, i32, i32) {
    %c0_i32 = arith.constant 0 : i32
    %c0_i32_0 = arith.constant 0 : i32
    return %arg0, %c0_i32, %arg1 : i32, i32, i32
  }
}

</mosaic_0001>

<llo_original>
// kernel: tpu_custom_call.1
$region0: #{tpu_custom_call.1}
  #allocation0 [shape = 'u32[]', space=smem, size = 0x4, offset = 0x4, fixed_abs, tag = 'smem constant byte address 0x4 - core index']
  #allocation1 [shape = 'u32[144,128]{1,0:T(1,128)}', space=vmem, size = 0x12000, scoped, tag = 'internal scratch']
  %s0 = inlined_call_operand.vmem [shape: f32[3,8,128], index: 0, kind: input, shape index: {}]
  %s1 = inlined_call_operand.vmem [shape: f32[8,1], index: 1, kind: input, shape index: {}]
  %s2 = inlined_call_operand.vmem [shape: f32[2,3,256], index: 2, kind: input, shape index: {}]
  %s3 = inlined_call_operand.vmem [shape: s32[2,1,256], index: 3, kind: input, shape index: {}]
  %s4 = inlined_call_operand.hbm [shape: f32[2,4,256], index: 4, kind: output, shape index: {}]
  %s5 = sld [smem:[#allocation0]]
  $region49: #{tpu_custom_call.1} parent=0
    _
  %s7 = ssub.s32 1, %s5
  %s8 = scalar_select 0, %s7, %s5
  $region1: #{tpu_custom_call.1} parent=0
    #allocation2 [shape = 'u8[8192]{0}', space=vmem, size = 0x2000, scoped, tag = 'output window, operand 0']
    #allocation3 [shape = 's32[2]{0}', space=sflag, size = 0x8, scoped, tag = 'scoped memory for tpu_custom_call.1']
    %9 = vsyncpa [#allocation3], 0
    %s10 = scalar_lea.sflag [#allocation3], 1
    %11 = vsyncpa %s10, 0
    loop: start=0, step=1, limit=4
    $region2: #{tpu_custom_call.1} parent=1 // loop_pre_header
      _
    $region3: #{tpu_custom_call.1} parent=1 // loop_header
      %s13 = sphi 0, %s17
      %p14 = scmp.ge.s32.totalorder %s13, 4
      %s20 = sphi 0, %s32
      %s21 = sphi 0, %s28
      %s22 = sphi 0, %s20
      %s23 = sphi 0, %s21
      %s24 = sphi 0, %s22
      %s25 = sphi 0, %s23
      %s33 = sphi 0, %s33
      %s35 = sphi 0, %s33
      %s36 = sphi 0, %s35
      %s50 = sphi 0, %s36
      %s54 = sphi 0, %s54
      %s56 = sphi 0, %s54
      %s57 = sphi 0, %s56
      %s71 = sphi 0, %s57
      %s79 = sphi 0, %s81
      %s82 = sphi 0, %s79
      %s83 = sphi 0, %s82
      %s99 = sphi 0, %s83
      %s107 = sphi 0, %s109
      %s110 = sphi 0, %s107
      %s111 = sphi 0, %s110
      %s127 = sphi 0, %s111
      %s135 = sphi 0, %s137
      %s138 = sphi 0, %s135
      %s139 = sphi 0, %s138
      %s155 = sphi 0, %s139
    $region4: #{tpu_custom_call.1} parent=1 // loop_header_branch
      %16 = sbr.rel (%p14) target = $region8
    $region5: #{tpu_custom_call.1} parent=1 // loop_body
      %s18 = ssub.s32 %s13, 1
      %s19 = ssub.s32 %s13, 2
      %s26 = sadd.s32 1, %s21
      %p27 = scmp.ge.s32.totalorder %s26, 1
      %s28 = scalar_select %p27, 0, %s26
      %s29 = sadd.s32 1, %s20
      %s30 = scalar_select %p27, %s29, %s20
      %p31 = scmp.ge.s32.totalorder %s30, 2
      %s32 = scalar_select %p31, 0, %s30
      %s34 = sadd.s32 %s33, 1
      %p37 = scmp.eq.s32.totalorder %s13, 1
      %p38 = scmp.ne.s32.totalorder %s33, %s35
      %p39 = scmp.eq.s32.totalorder %s13, 0
      %p40 = por %p38, %p39
      %p41 = scmp.ne.s32.totalorder %s33, %s35
      %p42 = scmp.eq.s32.totalorder %s18, 1
      %p43 = por %p41, %p42
      %p44 = scmp.ne.s32.totalorder %s35, %s36
      %p45 = scmp.eq.s32.totalorder %s18, 0
      %p46 = por %p44, %p45
      %p47 = scmp.ne.s32.totalorder %s35, %s36
      %p48 = scmp.eq.s32.totalorder %s19, 1
      %p49 = por %p47, %p48
      %p51 = scmp.ne.s32.totalorder %s36, %s50
      %p52 = scmp.eq.s32.totalorder %s19, 0
      %p53 = por %p51, %p52
      %s55 = sadd.s32 %s54, 1
      %p58 = scmp.eq.s32.totalorder %s13, 1
      %p59 = scmp.ne.s32.totalorder %s54, %s56
      %p60 = scmp.eq.s32.totalorder %s13, 0
      %p61 = por %p59, %p60
      %p62 = scmp.ne.s32.totalorder %s54, %s56
      %p63 = scmp.eq.s32.totalorder %s18, 1
      %p64 = por %p62, %p63
      %p65 = scmp.ne.s32.totalorder %s56, %s57
      %p66 = scmp.eq.s32.totalorder %s18, 0
      %p67 = por %p65, %p66
      %p68 = scmp.ne.s32.totalorder %s56, %s57
      %p69 = scmp.eq.s32.totalorder %s19, 1
      %p70 = por %p68, %p69
      %p72 = scmp.ne.s32.totalorder %s57, %s71
      %p73 = scmp.eq.s32.totalorder %s19, 0
      %p74 = por %p72, %p73
      %s75 = ssub.s32 %s20, %s32
      %s76 = ssub.s32 %s21, %s28
      %s77 = sor.u32 %s75, %s76
      %p78 = scmp.eq.s32.totalorder %s77, 0
      %s80 = sadd.s32 %s79, 1
      %s81 = scalar_select %p78, %s79, %s80
      %p84 = pneg %p78
      %p85 = scmp.eq.s32.totalorder %s13, 1
      %p86 = por %p84, %p85
      %p87 = scmp.ne.s32.totalorder %s79, %s82
      %p88 = scmp.eq.s32.totalorder %s13, 0
      %p89 = por %p87, %p88
      %p90 = scmp.ne.s32.totalorder %s79, %s82
      %p91 = scmp.eq.s32.totalorder %s18, 1
      %p92 = por %p90, %p91
      %p93 = scmp.ne.s32.totalorder %s82, %s83
      %p94 = scmp.eq.s32.totalorder %s18, 0
      %p95 = por %p93, %p94
      %p96 = scmp.ne.s32.totalorder %s82, %s83
      %p97 = scmp.eq.s32.totalorder %s19, 1
      %p98 = por %p96, %p97
      %p100 = scmp.ne.s32.totalorder %s83, %s99
      %p101 = scmp.eq.s32.totalorder %s19, 0
      %p102 = por %p100, %p101
      %s103 = ssub.s32 %s20, %s32
      %s104 = ssub.s32 %s21, %s28
      %s105 = sor.u32 %s103, %s104
      %p106 = scmp.eq.s32.totalorder %s105, 0
      %s108 = sadd.s32 %s107, 1
      %s109 = scalar_select %p106, %s107, %s108
      %p112 = pneg %p106
      %p113 = scmp.eq.s32.totalorder %s13, 1
      %p114 = por %p112, %p113
      %p115 = scmp.ne.s32.totalorder %s107, %s110
      %p116 = scmp.eq.s32.totalorder %s13, 0
      %p117 = por %p115, %p116
      %p118 = scmp.ne.s32.totalorder %s107, %s110
      %p119 = scmp.eq.s32.totalorder %s18, 1
      %p120 = por %p118, %p119
      %p121 = scmp.ne.s32.totalorder %s110, %s111
      %p122 = scmp.eq.s32.totalorder %s18, 0
      %p123 = por %p121, %p122
      %p124 = scmp.ne.s32.totalorder %s110, %s111
      %p125 = scmp.eq.s32.totalorder %s19, 1
      %p126 = por %p124, %p125
      %p128 = scmp.ne.s32.totalorder %s111, %s127
      %p129 = scmp.eq.s32.totalorder %s19, 0
      %p130 = por %p128, %p129
      %s131 = ssub.s32 %s20, %s32
      %s132 = ssub.s32 %s21, %s28
      %s133 = sor.u32 %s131, %s132
      %p134 = scmp.eq.s32.totalorder %s133, 0
      %s136 = sadd.s32 %s135, 1
      %s137 = scalar_select %p134, %s135, %s136
      %p140 = pneg %p134
      %p141 = scmp.eq.s32.totalorder %s13, 1
      %p142 = por %p140, %p141
      %p143 = scmp.ne.s32.totalorder %s135, %s138
      %p144 = scmp.eq.s32.totalorder %s13, 0
      %p145 = por %p143, %p144
      %p146 = scmp.ne.s32.totalorder %s135, %s138
      %p147 = scmp.eq.s32.totalorder %s18, 1
      %p148 = por %p146, %p147
      %p149 = scmp.ne.s32.totalorder %s138, %s139
      %p150 = scmp.eq.s32.totalorder %s18, 0
      %p151 = por %p149, %p150
      %p152 = scmp.ne.s32.totalorder %s138, %s139
      %p153 = scmp.eq.s32.totalorder %s19, 1
      %p154 = por %p152, %p153
      %p156 = scmp.ne.s32.totalorder %s139, %s155
      %p157 = scmp.eq.s32.totalorder %s19, 0
      %p158 = por %p156, %p157
      %p159 = scmp.le.s32.totalorder 1, %s13
      %p160 = scmp.lt.s32.totalorder %s13, 3
      %p161 = pnand %p159, %p160
      %p162 = pneg %p161
      // Predicated region
      $region9: #{tpu_custom_call.1} parent=5 // pred_check
        _
      $region10: #{tpu_custom_call.1} parent=5 // pred_check_branch
        %164 = sbr.rel (%p161) target = $region12
      $region11: #{tpu_custom_call.1} parent=5 // pred_region
        %s165 = ssub.s32 %s13, 1
        // Predicated region
        $region13: #{tpu_custom_call.1} parent=11 // pred_check
          %p166 = pneg %p46
        $region14: #{tpu_custom_call.1} parent=11 // pred_check_branch
          %168 = sbr.rel (%p166) target = $region16
        $region15: #{tpu_custom_call.1} parent=11 // pred_region
          _
        $region16: #{tpu_custom_call.1} parent=11 // pred_fallthru
          _
        // Predicated region
        $region17: #{tpu_custom_call.1} parent=11 // pred_check
          %p169 = pneg %p67
        $region18: #{tpu_custom_call.1} parent=11 // pred_check_branch
          %171 = sbr.rel (%p169) target = $region20
        $region19: #{tpu_custom_call.1} parent=11 // pred_region
          _
        $region20: #{tpu_custom_call.1} parent=11 // pred_fallthru
          _
      $region12: #{tpu_custom_call.1} parent=5 // pred_fallthru
        _
      %p172 = scmp.lt.s32.totalorder %s13, 2
      // Predicated region
      $region21: #{tpu_custom_call.1} parent=5 // pred_check
        %p173 = pneg %p172
      $region22: #{tpu_custom_call.1} parent=5 // pred_check_branch
        %175 = sbr.rel (%p173) target = $region24
      $region23: #{tpu_custom_call.1} parent=5 // pred_region
        // Predicated region
        $region25: #{tpu_custom_call.1} parent=23 // pred_check
          %p176 = pneg %p89
        $region26: #{tpu_custom_call.1} parent=23 // pred_check_branch
          %178 = sbr.rel (%p176) target = $region28
        $region27: #{tpu_custom_call.1} parent=23 // pred_region
          %s179 = smul.u32 2, %s21
          %p180 = scmp.lt.s32.totalorder %s20, 1
          %s181 = scalar_select %p180, %s20, 1
          %p182 = scmp.lt.s32.totalorder %s179, 1
          %s183 = scalar_select %p182, %s179, 1
          %s184 = smul.addr %s181, 2
          %s185 = sadd.s32 %s183, %s184
          %s186 = smul.addr %s185, 4
          %s187 = scalar_lea.vmem %s2, %s186
          %s188 = smul.u32 2, %s21
        $region28: #{tpu_custom_call.1} parent=23 // pred_fallthru
          _
        // Predicated region
        $region29: #{tpu_custom_call.1} parent=23 // pred_check
          %p189 = pneg %p117
        $region30: #{tpu_custom_call.1} parent=23 // pred_check_branch
          %191 = sbr.rel (%p189) target = $region32
        $region31: #{tpu_custom_call.1} parent=23 // pred_region
          %s192 = smul.u32 2, %s21
          %p193 = scmp.lt.s32.totalorder %s20, 1
          %s194 = scalar_select %p193, %s20, 1
          %p195 = scmp.lt.s32.totalorder %s192, 1
          %s196 = scalar_select %p195, %s192, 1
          %s197 = smul.addr %s194, 2
          %s198 = sadd.s32 %s196, %s197
          %s199 = scalar_lea.vmem %s3, %s198
          %s200 = smul.u32 2, %s21
        $region32: #{tpu_custom_call.1} parent=23 // pred_fallthru
          _
      $region24: #{tpu_custom_call.1} parent=5 // pred_fallthru
        _
      %p201 = scmp.le.s32.totalorder 1, %s13
      %p202 = scmp.lt.s32.totalorder %s13, 3
      %p203 = pnand %p201, %p202
      %p204 = pneg %p203
      // Predicated region
      $region33: #{tpu_custom_call.1} parent=5 // pred_check
        _
      $region34: #{tpu_custom_call.1} parent=5 // pred_check_branch
        %206 = sbr.rel (%p203) target = $region36
      $region35: #{tpu_custom_call.1} parent=5 // pred_region
        %s207 = ssub.s32 %s13, 1
        %p208 = pneg %p46
        %p209 = pneg %p43
        %p210 = pneg %p67
        %p211 = pneg %p64
        %s212 = smul.u32 2, %s23
        %p213 = scmp.lt.s32.totalorder %s22, 1
        %s214 = scalar_select %p213, %s22, 1
        %p215 = scmp.lt.s32.totalorder %s212, 1
        %s216 = scalar_select %p215, %s212, 1
        %s217 = smul.addr %s214, 2
        %s218 = sadd.s32 %s216, %s217
        %s219 = smul.addr %s218, 4
        %s220 = scalar_lea.vmem %s2, %s219
        %p221 = pneg %p95
        %p222 = pneg %p92
        %s223 = smul.u32 2, %s23
        %p224 = scmp.lt.s32.totalorder %s22, 1
        %s225 = scalar_select %p224, %s22, 1
        %p226 = scmp.lt.s32.totalorder %s223, 1
        %s227 = scalar_select %p226, %s223, 1
        %s228 = smul.addr %s225, 2
        %s229 = sadd.s32 %s227, %s228
        %s230 = scalar_lea.vmem %s3, %s229
        %p231 = pneg %p123
        %p232 = pneg %p120
        %p233 = pneg %p151
        %p234 = pneg %p148
        %s235 = sand.u32 %s138, 1
        %s236 = scalar_lea.sflag [#allocation3], %s235
        %s237 = sand.u32 %s138, 1
        %s238 = smul.addr %s237, 8
        %s239 = scalar_lea.vmem [#allocation2], %s238
        %s240 = smul.u32 2, %s23
        %p241 = scmp.lt.s32.totalorder %s22, 1
        %s242 = scalar_select %p241, %s22, 1
        %p243 = scmp.lt.s32.totalorder %s240, 1
        %s244 = scalar_select %p243, %s240, 1
        %s245 = smul.addr %s242, 2
        %s246 = sadd.s32 %s244, %s245
        %s247 = smul.addr %s246, 4
        %s248 = scalar_lea.vmem %s2, %s247
        %s249 = smul.u32 2, %s23
        %s250 = smul.u32 2, %s23
        %p251 = scmp.lt.s32.totalorder %s22, 1
        %s252 = scalar_select %p251, %s22, 1
        %p253 = scmp.lt.s32.totalorder %s250, 1
        %s254 = scalar_select %p253, %s250, 1
        %s255 = smul.addr %s252, 2
        %s256 = sadd.s32 %s254, %s255
        %s257 = scalar_lea.vmem %s3, %s256
        %s258 = smul.u32 2, %s23
        %s259 = smul.u32 2, %s23
        %v260 = vld [vmem:[%s257] sm:$0x3]
        %vm261 = vcmp.lt.s32.totalorder %v260, 0
        %v262 = vld [vmem:[%s248] sm:$0x77]
        %v263 = vlaneseq
        %v264 = vshrl.u32 %v263, 7
        %v265 = vadd.s32 %v264, 8
        %v266 = vadd.s32 %v264, 16
        %v267 = vadd.s32 %v264, 24
        %v268 = vadd.s32 %v264, 32
        %v269 = vadd.s32 %v264, 40
        %v270 = vadd.s32 %v264, 48
        %v271 = vadd.s32 %v264, 56
        %v272 = vadd.s32 %v264, 64
        %v273 = vadd.s32 %v264, 72
        %v274 = vadd.s32 %v264, 80
        %v275 = vadd.s32 %v264, 88
        %v276 = vadd.s32 %v264, 96
        %v277 = vadd.s32 %v264, 104
        %v278 = vadd.s32 %v264, 112
        %v279 = vadd.s32 %v264, 120
        %v280 = vlaneseq
        %v281 = vshrl.u32 %v280, 7
        %v282 = vsub.s32 0, %v281
        %v283 = vrot.slane %v260, %v282
        %v284 = vlaneseq
        %v285 = vshrl.u32 %v284, 7
        %v286 = vsub.s32 1, %v285
        %v287 = vrot.slane %v260, %v286
        %vm288 = vcmp.eq.s32.totalorder %v264, %v283
        %vm289 = vcmp.eq.s32.totalorder %v264, %v287
        %vm290 = vcmp.eq.s32.totalorder %v265, %v283
        %vm291 = vcmp.eq.s32.totalorder %v265, %v287
        %vm292 = vcmp.eq.s32.totalorder %v266, %v283
        %vm293 = vcmp.eq.s32.totalorder %v266, %v287
        %vm294 = vcmp.eq.s32.totalorder %v267, %v283
        %vm295 = vcmp.eq.s32.totalorder %v267, %v287
        %vm296 = vcmp.eq.s32.totalorder %v268, %v283
        %vm297 = vcmp.eq.s32.totalorder %v268, %v287
        %vm298 = vcmp.eq.s32.totalorder %v269, %v283
        %vm299 = vcmp.eq.s32.totalorder %v269, %v287
        %vm300 = vcmp.eq.s32.totalorder %v270, %v283
        %vm301 = vcmp.eq.s32.totalorder %v270, %v287
        %vm302 = vcmp.eq.s32.totalorder %v271, %v283
        %vm303 = vcmp.eq.s32.totalorder %v271, %v287
        %vm304 = vcmp.eq.s32.totalorder %v272, %v283
        %vm305 = vcmp.eq.s32.totalorder %v272, %v287
        %vm306 = vcmp.eq.s32.totalorder %v273, %v283
        %vm307 = vcmp.eq.s32.totalorder %v273, %v287
        %vm308 = vcmp.eq.s32.totalorder %v274, %v283
        %vm309 = vcmp.eq.s32.totalorder %v274, %v287
        %vm310 = vcmp.eq.s32.totalorder %v275, %v283
        %vm311 = vcmp.eq.s32.totalorder %v275, %v287
        %vm312 = vcmp.eq.s32.totalorder %v276, %v283
        %vm313 = vcmp.eq.s32.totalorder %v276, %v287
        %vm314 = vcmp.eq.s32.totalorder %v277, %v283
        %vm315 = vcmp.eq.s32.totalorder %v277, %v287
        %vm316 = vcmp.eq.s32.totalorder %v278, %v283
        %vm317 = vcmp.eq.s32.totalorder %v278, %v287
        %vm318 = vcmp.eq.s32.totalorder %v279, %v283
        %vm319 = vcmp.eq.s32.totalorder %v279, %v287
        %v320 = vld [vmem:[%s0] sm:$0xff]
        %v322 = vlaneseq
        %v323 = vshrl.u32 %v322, 7
        %v324 = vsub.s32 0, %v323
        %v325 = vrot.slane %v262, %v324
        %v326 = vlaneseq
        %v327 = vshrl.u32 %v326, 7
        %v328 = vsub.s32 4, %v327
        %v329 = vrot.slane %v262, %v328
        %v332 = vlaneseq
        %v333 = vshrl.u32 %v332, 7
        %v334 = vsub.s32 0, %v333
        %v335 = vrot.slane %v325, %v334
        %v336 = vlaneseq
        %v337 = vshrl.u32 %v336, 7
        %v338 = vsub.s32 0, %v337
        %v339 = vrot.slane %v329, %v338
        %v340 = vsel %vm288, %v335, 0.0
        %v341 = vsel %vm289, %v339, 0.0
        %v342 = vsel %vm290, %v335, 0.0
        %v343 = vsel %vm291, %v339, 0.0
        %v344 = vsel %vm292, %v335, 0.0
        %v345 = vsel %vm293, %v339, 0.0
        %v346 = vsel %vm294, %v335, 0.0
        %v347 = vsel %vm295, %v339, 0.0
        %v348 = vsel %vm296, %v335, 0.0
        %v349 = vsel %vm297, %v339, 0.0
        %v350 = vsel %vm298, %v335, 0.0
        %v351 = vsel %vm299, %v339, 0.0
        %v352 = vsel %vm300, %v335, 0.0
        %v353 = vsel %vm301, %v339, 0.0
        %v354 = vsel %vm302, %v335, 0.0
        %v355 = vsel %vm303, %v339, 0.0
        %v356 = vsel %vm304, %v335, 0.0
        %v357 = vsel %vm305, %v339, 0.0
        %v358 = vsel %vm306, %v335, 0.0
        %v359 = vsel %vm307, %v339, 0.0
        %v360 = vsel %vm308, %v335, 0.0
        %v361 = vsel %vm309, %v339, 0.0
        %v362 = vsel %vm310, %v335, 0.0
        %v363 = vsel %vm311, %v339, 0.0
        %v364 = vsel %vm312, %v335, 0.0
        %v365 = vsel %vm313, %v339, 0.0
        %v366 = vsel %vm314, %v335, 0.0
        %v367 = vsel %vm315, %v339, 0.0
        %v368 = vsel %vm316, %v335, 0.0
        %v369 = vsel %vm317, %v339, 0.0
        %v370 = vsel %vm318, %v335, 0.0
        %v371 = vsel %vm319, %v339, 0.0
        %s372 = scalar_lea.vmem %s0, 8
        %v373 = vld [vmem:[%s372] sm:$0xff]
        %v374 = vlaneseq
        %v375 = vshrl.u32 %v374, 7
        %v376 = vsub.s32 1, %v375
        %v377 = vrot.slane %v262, %v376
        %v378 = vlaneseq
        %v379 = vshrl.u32 %v378, 7
        %v380 = vsub.s32 5, %v379
        %v381 = vrot.slane %v262, %v380
        %v384 = vlaneseq
        %v385 = vshrl.u32 %v384, 7
        %v386 = vsub.s32 1, %v385
        %v387 = vrot.slane %v377, %v386
        %v388 = vlaneseq
        %v389 = vshrl.u32 %v388, 7
        %v390 = vsub.s32 1, %v389
        %v391 = vrot.slane %v381, %v390
        %v392 = vsel %vm288, %v387, 0.0
        %v393 = vsel %vm289, %v391, 0.0
        %v394 = vsel %vm290, %v387, 0.0
        %v395 = vsel %vm291, %v391, 0.0
        %v396 = vsel %vm292, %v387, 0.0
        %v397 = vsel %vm293, %v391, 0.0
        %v398 = vsel %vm294, %v387, 0.0
        %v399 = vsel %vm295, %v391, 0.0
        %v400 = vsel %vm296, %v387, 0.0
        %v401 = vsel %vm297, %v391, 0.0
        %v402 = vsel %vm298, %v387, 0.0
        %v403 = vsel %vm299, %v391, 0.0
        %v404 = vsel %vm300, %v387, 0.0
        %v405 = vsel %vm301, %v391, 0.0
        %v406 = vsel %vm302, %v387, 0.0
        %v407 = vsel %vm303, %v391, 0.0
        %v408 = vsel %vm304, %v387, 0.0
        %v409 = vsel %vm305, %v391, 0.0
        %v410 = vsel %vm306, %v387, 0.0
        %v411 = vsel %vm307, %v391, 0.0
        %v412 = vsel %vm308, %v387, 0.0
        %v413 = vsel %vm309, %v391, 0.0
        %v414 = vsel %vm310, %v387, 0.0
        %v415 = vsel %vm311, %v391, 0.0
        %v416 = vsel %vm312, %v387, 0.0
        %v417 = vsel %vm313, %v391, 0.0
        %v418 = vsel %vm314, %v387, 0.0
        %v419 = vsel %vm315, %v391, 0.0
        %v420 = vsel %vm316, %v387, 0.0
        %v421 = vsel %vm317, %v391, 0.0
        %v422 = vsel %vm318, %v387, 0.0
        %v423 = vsel %vm319, %v391, 0.0
        %424 = vmatprep.subr.mxu0 %v393
        %425 = vmatpush1.msra.mxu0 %v392
        %426 = vmatprep.subr.mxu0 %v395
        %427 = vmatpush1.msra.mxu0 %v394
        %428 = vmatprep.subr.mxu0 %v397
        %429 = vmatpush1.msra.mxu0 %v396
        %430 = vmatprep.subr.mxu0 %v399
        %431 = vmatpush1.msra.mxu0 %v398
        %432 = vmatprep.subr.mxu0 %v401
        %433 = vmatpush1.msra.mxu0 %v400
        %434 = vmatprep.subr.mxu0 %v403
        %435 = vmatpush1.msra.mxu0 %v402
        %436 = vmatprep.subr.mxu0 %v405
        %437 = vmatpush1.msra.mxu0 %v404
        %438 = vmatprep.subr.mxu0 %v407
        %439 = vmatpush1.msra.mxu0 %v406
        %440 = vmatprep.subr.mxu0 %v409
        %441 = vmatpush1.msra.mxu0 %v408
        %442 = vmatprep.subr.mxu0 %v411
        %443 = vmatpush1.msra.mxu0 %v410
        %444 = vmatprep.subr.mxu0 %v413
        %445 = vmatpush1.msra.mxu0 %v412
        %446 = vmatprep.subr.mxu0 %v415
        %447 = vmatpush1.msra.mxu0 %v414
        %448 = vmatprep.subr.mxu0 %v417
        %449 = vmatpush1.msra.mxu0 %v416
        %450 = vmatprep.subr.mxu0 %v419
        %451 = vmatpush1.msra.mxu0 %v418
        %452 = vmatprep.subr.mxu0 %v421
        %453 = vmatpush1.msra.mxu0 %v420
        %454 = vmatprep.subr.mxu0 %v423
        %455 = vmatpush1.msra.mxu0 %v422
        %456 = vmatprep.subr.mxu0 0.0
        %457 = vmatpush1.msra.mxu0 0.0
        %458 = vmatprep.subr.mxu0 0.0
        %459 = vmatpush1.msra.mxu0 0.0
        %460 = vmatprep.subr.mxu0 0.0
        %461 = vmatpush1.msra.mxu0 0.0
        %462 = vmatprep.subr.mxu0 0.0
        %463 = vmatpush1.msra.mxu0 0.0
        %464 = vmatprep.subr.mxu0 0.0
        %465 = vmatpush1.msra.mxu0 0.0
        %466 = vmatprep.subr.mxu0 0.0
        %467 = vmatpush1.msra.mxu0 0.0
        %468 = vmatprep.subr.mxu0 0.0
        %469 = vmatpush1.msra.mxu0 0.0
        %470 = vmatprep.subr.mxu0 0.0
        %471 = vmatpush1.msra.mxu0 0.0
        %472 = vmatprep.subr.mxu0 0.0
        %473 = vmatpush1.msra.mxu0 0.0
        %474 = vmatprep.subr.mxu0 0.0
        %475 = vmatpush1.msra.mxu0 0.0
        %476 = vmatprep.subr.mxu0 0.0
        %477 = vmatpush1.msra.mxu0 0.0
        %478 = vmatprep.subr.mxu0 0.0
        %479 = vmatpush1.msra.mxu0 0.0
        %480 = vmatprep.subr.mxu0 0.0
        %481 = vmatpush1.msra.mxu0 0.0
        %482 = vmatprep.subr.mxu0 0.0
        %483 = vmatpush1.msra.mxu0 0.0
        %484 = vmatprep.subr.mxu0 0.0
        %485 = vmatpush1.msra.mxu0 0.0
        %486 = vmatprep.subr.mxu0 0.0
        %487 = vmatpush1.msra.mxu0 0.0
        %488 = vmatprep.mubr.f32.mxu0 0.0
        %489 = vmatmul.mubr.f32.gmra.mrb[0].mxu0 %v373
        %v490 = vpop.f32.mrb[0].mxu0
        %v491 = vadd.f32 0.0, %v490
        %v492 = vpop.f32.mrb[0].mxu0
        %v493 = vadd.f32 0.0, %v492
        %494 = vdwg.mxu0
        %495 = vmatprep.subr.mxu0 %v341
        %496 = vmatpush1.msra.mxu0 %v340
        %497 = vmatprep.subr.mxu0 %v343
        %498 = vmatpush1.msra.mxu0 %v342
        %499 = vmatprep.subr.mxu0 %v345
        %500 = vmatpush1.msra.mxu0 %v344
        %501 = vmatprep.subr.mxu0 %v347
        %502 = vmatpush1.msra.mxu0 %v346
        %503 = vmatprep.subr.mxu0 %v349
        %504 = vmatpush1.msra.mxu0 %v348
        %505 = vmatprep.subr.mxu0 %v351
        %506 = vmatpush1.msra.mxu0 %v350
        %507 = vmatprep.subr.mxu0 %v353
        %508 = vmatpush1.msra.mxu0 %v352
        %509 = vmatprep.subr.mxu0 %v355
        %510 = vmatpush1.msra.mxu0 %v354
        %511 = vmatprep.subr.mxu0 %v357
        %512 = vmatpush1.msra.mxu0 %v356
        %513 = vmatprep.subr.mxu0 %v359
        %514 = vmatpush1.msra.mxu0 %v358
        %515 = vmatprep.subr.mxu0 %v361
        %516 = vmatpush1.msra.mxu0 %v360
        %517 = vmatprep.subr.mxu0 %v363
        %518 = vmatpush1.msra.mxu0 %v362
        %519 = vmatprep.subr.mxu0 %v365
        %520 = vmatpush1.msra.mxu0 %v364
        %521 = vmatprep.subr.mxu0 %v367
        %522 = vmatpush1.msra.mxu0 %v366
        %523 = vmatprep.subr.mxu0 %v369
        %524 = vmatpush1.msra.mxu0 %v368
        %525 = vmatprep.subr.mxu0 %v371
        %526 = vmatpush1.msra.mxu0 %v370
        %527 = vmatprep.subr.mxu0 0.0
        %528 = vmatpush1.msra.mxu0 0.0
        %529 = vmatprep.subr.mxu0 0.0
        %530 = vmatpush1.msra.mxu0 0.0
        %531 = vmatprep.subr.mxu0 0.0
        %532 = vmatpush1.msra.mxu0 0.0
        %533 = vmatprep.subr.mxu0 0.0
        %534 = vmatpush1.msra.mxu0 0.0
        %535 = vmatprep.subr.mxu0 0.0
        %536 = vmatpush1.msra.mxu0 0.0
        %537 = vmatprep.subr.mxu0 0.0
        %538 = vmatpush1.msra.mxu0 0.0
        %539 = vmatprep.subr.mxu0 0.0
        %540 = vmatpush1.msra.mxu0 0.0
        %541 = vmatprep.subr.mxu0 0.0
        %542 = vmatpush1.msra.mxu0 0.0
        %543 = vmatprep.subr.mxu0 0.0
        %544 = vmatpush1.msra.mxu0 0.0
        %545 = vmatprep.subr.mxu0 0.0
        %546 = vmatpush1.msra.mxu0 0.0
        %547 = vmatprep.subr.mxu0 0.0
        %548 = vmatpush1.msra.mxu0 0.0
        %549 = vmatprep.subr.mxu0 0.0
        %550 = vmatpush1.msra.mxu0 0.0
        %551 = vmatprep.subr.mxu0 0.0
        %552 = vmatpush1.msra.mxu0 0.0
        %553 = vmatprep.subr.mxu0 0.0
        %554 = vmatpush1.msra.mxu0 0.0
        %555 = vmatprep.subr.mxu0 0.0
        %556 = vmatpush1.msra.mxu0 0.0
        %557 = vmatprep.subr.mxu0 0.0
        %558 = vmatpush1.msra.mxu0 0.0
        %559 = vmatprep.mubr.f32.mxu0 0.0
        %560 = vmatmul.mubr.f32.gmra.mrb[0].mxu0 %v320
        %v561 = vpop.f32.mrb[0].mxu0
        %v562 = vadd.f32 %v491, %v561
        %v563 = vpop.f32.mrb[0].mxu0
        %v564 = vadd.f32 %v493, %v563
        %565 = vdwg.mxu0
        %s566 = scalar_lea.vmem %s0, 16
        %v567 = vld [vmem:[%s566] sm:$0xff]
        %v568 = vlaneseq
        %v569 = vshrl.u32 %v568, 7
        %v570 = vsub.s32 2, %v569
        %v571 = vrot.slane %v262, %v570
        %v572 = vlaneseq
        %v573 = vshrl.u32 %v572, 7
        %v574 = vsub.s32 6, %v573
        %v575 = vrot.slane %v262, %v574
        %v578 = vlaneseq
        %v579 = vshrl.u32 %v578, 7
        %v580 = vsub.s32 2, %v579
        %v581 = vrot.slane %v571, %v580
        %v582 = vlaneseq
        %v583 = vshrl.u32 %v582, 7
        %v584 = vsub.s32 2, %v583
        %v585 = vrot.slane %v575, %v584
        %v586 = vsel %vm288, %v581, 0.0
        %v587 = vsel %vm289, %v585, 0.0
        %v588 = vsel %vm290, %v581, 0.0
        %v589 = vsel %vm291, %v585, 0.0
        %v590 = vsel %vm292, %v581, 0.0
        %v591 = vsel %vm293, %v585, 0.0
        %v592 = vsel %vm294, %v581, 0.0
        %v593 = vsel %vm295, %v585, 0.0
        %v594 = vsel %vm296, %v581, 0.0
        %v595 = vsel %vm297, %v585, 0.0
        %v596 = vsel %vm298, %v581, 0.0
        %v597 = vsel %vm299, %v585, 0.0
        %v598 = vsel %vm300, %v581, 0.0
        %v599 = vsel %vm301, %v585, 0.0
        %v600 = vsel %vm302, %v581, 0.0
        %v601 = vsel %vm303, %v585, 0.0
        %v602 = vsel %vm304, %v581, 0.0
        %v603 = vsel %vm305, %v585, 0.0
        %v604 = vsel %vm306, %v581, 0.0
        %v605 = vsel %vm307, %v585, 0.0
        %v606 = vsel %vm308, %v581, 0.0
        %v607 = vsel %vm309, %v585, 0.0
        %v608 = vsel %vm310, %v581, 0.0
        %v609 = vsel %vm311, %v585, 0.0
        %v610 = vsel %vm312, %v581, 0.0
        %v611 = vsel %vm313, %v585, 0.0
        %v612 = vsel %vm314, %v581, 0.0
        %v613 = vsel %vm315, %v585, 0.0
        %v614 = vsel %vm316, %v581, 0.0
        %v615 = vsel %vm317, %v585, 0.0
        %v616 = vsel %vm318, %v581, 0.0
        %v617 = vsel %vm319, %v585, 0.0
        %618 = vmatprep.subr.mxu0 %v587
        %619 = vmatpush1.msra.mxu0 %v586
        %620 = vmatprep.subr.mxu0 %v589
        %621 = vmatpush1.msra.mxu0 %v588
        %622 = vmatprep.subr.mxu0 %v591
        %623 = vmatpush1.msra.mxu0 %v590
        %624 = vmatprep.subr.mxu0 %v593
        %625 = vmatpush1.msra.mxu0 %v592
        %626 = vmatprep.subr.mxu0 %v595
        %627 = vmatpush1.msra.mxu0 %v594
        %628 = vmatprep.subr.mxu0 %v597
        %629 = vmatpush1.msra.mxu0 %v596
        %630 = vmatprep.subr.mxu0 %v599
        %631 = vmatpush1.msra.mxu0 %v598
        %632 = vmatprep.subr.mxu0 %v601
        %633 = vmatpush1.msra.mxu0 %v600
        %634 = vmatprep.subr.mxu0 %v603
        %635 = vmatpush1.msra.mxu0 %v602
        %636 = vmatprep.subr.mxu0 %v605
        %637 = vmatpush1.msra.mxu0 %v604
        %638 = vmatprep.subr.mxu0 %v607
        %639 = vmatpush1.msra.mxu0 %v606
        %640 = vmatprep.subr.mxu0 %v609
        %641 = vmatpush1.msra.mxu0 %v608
        %642 = vmatprep.subr.mxu0 %v611
        %643 = vmatpush1.msra.mxu0 %v610
        %644 = vmatprep.subr.mxu0 %v613
        %645 = vmatpush1.msra.mxu0 %v612
        %646 = vmatprep.subr.mxu0 %v615
        %647 = vmatpush1.msra.mxu0 %v614
        %648 = vmatprep.subr.mxu0 %v617
        %649 = vmatpush1.msra.mxu0 %v616
        %650 = vmatprep.subr.mxu0 0.0
        %651 = vmatpush1.msra.mxu0 0.0
        %652 = vmatprep.subr.mxu0 0.0
        %653 = vmatpush1.msra.mxu0 0.0
        %654 = vmatprep.subr.mxu0 0.0
        %655 = vmatpush1.msra.mxu0 0.0
        %656 = vmatprep.subr.mxu0 0.0
        %657 = vmatpush1.msra.mxu0 0.0
        %658 = vmatprep.subr.mxu0 0.0
        %659 = vmatpush1.msra.mxu0 0.0
        %660 = vmatprep.subr.mxu0 0.0
        %661 = vmatpush1.msra.mxu0 0.0
        %662 = vmatprep.subr.mxu0 0.0
        %663 = vmatpush1.msra.mxu0 0.0
        %664 = vmatprep.subr.mxu0 0.0
        %665 = vmatpush1.msra.mxu0 0.0
        %666 = vmatprep.subr.mxu0 0.0
        %667 = vmatpush1.msra.mxu0 0.0
        %668 = vmatprep.subr.mxu0 0.0
        %669 = vmatpush1.msra.mxu0 0.0
        %670 = vmatprep.subr.mxu0 0.0
        %671 = vmatpush1.msra.mxu0 0.0
        %672 = vmatprep.subr.mxu0 0.0
        %673 = vmatpush1.msra.mxu0 0.0
        %674 = vmatprep.subr.mxu0 0.0
        %675 = vmatpush1.msra.mxu0 0.0
        %676 = vmatprep.subr.mxu0 0.0
        %677 = vmatpush1.msra.mxu0 0.0
        %678 = vmatprep.subr.mxu0 0.0
        %679 = vmatpush1.msra.mxu0 0.0
        %680 = vmatprep.subr.mxu0 0.0
        %681 = vmatpush1.msra.mxu0 0.0
        %682 = vmatprep.mubr.f32.mxu0 0.0
        %683 = vmatmul.mubr.f32.gmra.mrb[0].mxu0 %v567
        %v684 = vpop.f32.mrb[0].mxu0
        %v685 = vadd.f32 0.0, %v684
        %v686 = vpop.f32.mrb[0].mxu0
        %v687 = vadd.f32 0.0, %v686
        %688 = vdwg.mxu0
        %v689 = vadd.f32 %v562, %v685
        %v690 = vadd.f32 %v564, %v687
        %vm691 = vcmp.eq.s32.totalorder %v264, 3
        %v692 = vsel %vm261, 1, 0
        %v693 = vlaneseq
        %v694 = vshrl.u32 %v693, 7
        %v695 = vsub.s32 0, %v694
        %v696 = vrot.slane %v692, %v695
        %v697 = vlaneseq
        %v698 = vshrl.u32 %v697, 7
        %v699 = vsub.s32 1, %v698
        %v700 = vrot.slane %v692, %v699
        %vm701 = vcmp.eq.s32.totalorder %v696, 1
        %vm702 = vcmp.eq.s32.totalorder %v700, 1
        %v703 = vsel %vm691, 1, 0
        %vm704 = vcmp.eq.s32.totalorder %v703, 1
        %vm705 = vmor %vm701, %vm704
        %vm706 = vmor %vm702, %vm704
        %v707 = vld [vmem:[%s1] sm:$0xf]
        %709 = vset.pattern.permute.xlu0 0
        %710 = vperm.xlu0 %709, %v707
        %v711 = vpop.permute.xlu0 %710
        %v713 = vsel %vm705, %v711, %v689
        %v714 = vsel %vm706, %v711, %v690
        %v717 = vcombine.low %v713, %v714
        %719 = vst [vmem:[%s239] sm:$0xff] %v717
        %s720 = sand.u32 %s138, 1
        %s721 = scalar_lea.sflag [#allocation3], %s720
        %s722 = sand.u32 %s138, 1
        %s723 = smul.addr %s722, 8
        %s724 = scalar_lea.vmem [#allocation2], %s723
        // Predicated region
        $region37: #{tpu_custom_call.1} parent=35 // pred_check
          %p725 = pneg %p148
        $region38: #{tpu_custom_call.1} parent=35 // pred_check_branch
          %727 = sbr.rel (%p725) target = $region40
        $region39: #{tpu_custom_call.1} parent=35 // pred_region
          %s728 = smul.u32 2, %s23
          %s730 = ssub.s32 128, 128
          %731 = vsyncadd %s721, %s730
          %s732 = smul.addr %s22, 2
          %s733 = sadd.s32 %s728, %s732
          %s734 = smul.addr %s733, 64
          %s735 = scalar_lea.hbm %s4, %s734
          %s737 = sshll.u32 %s724, 4
          %s738 = int_to_ptr.vmem [resolvable:$true] %s737
          %740 = dma.vmem_to_hbm [thread:$0]  %s738, 128, %s735, %s721
        $region40: #{tpu_custom_call.1} parent=35 // pred_fallthru
          _
      $region36: #{tpu_custom_call.1} parent=5 // pred_fallthru
        _
      %p741 = scmp.le.s32.totalorder 2, %s13
      // Predicated region
      $region41: #{tpu_custom_call.1} parent=5 // pred_check
        %p742 = pneg %p741
      $region42: #{tpu_custom_call.1} parent=5 // pred_check_branch
        %744 = sbr.rel (%p742) target = $region44
      $region43: #{tpu_custom_call.1} parent=5 // pred_region
        %s745 = ssub.s32 %s13, 2
        // Predicated region
        $region45: #{tpu_custom_call.1} parent=43 // pred_check
          %p746 = pneg %p154
        $region46: #{tpu_custom_call.1} parent=43 // pred_check_branch
          %748 = sbr.rel (%p746) target = $region48
        $region47: #{tpu_custom_call.1} parent=43 // pred_region
          %s749 = sand.u32 %s139, 1
          %s750 = scalar_lea.sflag [#allocation3], %s749
          %s751 = sand.u32 %s139, 1
          %s752 = smul.addr %s751, 8
          %s753 = scalar_lea.vmem [#allocation2], %s752
          %754 = dma.done %s750, 128
        $region48: #{tpu_custom_call.1} parent=43 // pred_fallthru
          _
      $region44: #{tpu_custom_call.1} parent=5 // pred_fallthru
        _
    $region6: #{tpu_custom_call.1} parent=1 // loop_footer
      %s17 = sadd.s32 1, %s13
    $region7: #{tpu_custom_call.1} parent=1 // loop_footer_branch
      %12 = sbr.rel target = $region3
    $region8: #{tpu_custom_call.1} parent=1 // loop_exit
      _
    %755 = vsyncpa [#allocation3], 1
    %s756 = scalar_lea.sflag [#allocation3], 1
    %757 = vsyncpa %s756, 1

</llo_original>
